<compile_context>
chip_gen: v5e
topology: v5e:2x2
jax: 0.10.0
libtpu: 0.0.40
codegen_flags: <defaults>
</compile_context>

<pallas_src>
import jax
import jax.numpy as jnp
from jax.experimental import pallas as pl
from jax.experimental.pallas import tpu as pltpu

IN_FEATURES = 20
HIDDEN = 2
OUT_FEATURES = 1

# Max batch tile on the lane axis.  Padded VMEM per grid step at 8192:
#   xT block  [20, 8192] f32 -> stored [24, 8192]  = 0.75 MiB  (x2 buffers)
#   out block [ 1, 8192] f32 -> stored [ 8, 8192]  = 0.25 MiB  (x2 buffers)
# ~2 MiB total: comfortably under v5e's 16 MiB scoped VMEM, v6e/v7x's 32 MiB
# scoped limit, and v7x's 64 MiB physical VMEM.
TILE_B_MAX = 8192


def _dense_nn_kernel(w1_ref, b1_ref, w2_ref, b2_ref, xt_ref, ot_ref):
    """Fused forward on one batch tile (batch on the lane axis).

    w1_ref : [HIDDEN, IN_FEATURES]  VMEM (PyTorch [out, in] layout, resident)
    b1_ref : [HIDDEN]               SMEM
    w2_ref : [HIDDEN]               SMEM (fc2 weight row, flattened)
    b2_ref : [OUT_FEATURES]         SMEM
    xt_ref : [IN_FEATURES, TILE_B]  VMEM (x transposed; streamed)
    ot_ref : [OUT_FEATURES, TILE_B] VMEM (y transposed; lane-dense)
    """
    # fc1 on the MXU: [2, 20] @ [20, TILE_B] -> [2, TILE_B], f32 accumulate.
    ht = jnp.dot(w1_ref[...], xt_ref[...], preferred_element_type=jnp.float32)
    # Bias + ReLU per hidden row (bias scalars live in SMEM).
    h0 = jnp.maximum(ht[0:1, :] + b1_ref[0], 0.0)
    h1 = jnp.maximum(ht[1:2, :] + b1_ref[1], 0.0)
    # fc2 is a K=2, N=1 contraction: do it as a VPU FMA, not an MXU matmul.
    y = h0 * w2_ref[0] + h1 * w2_ref[1] + b2_ref[0]
    ot_ref[...] = y.astype(ot_ref.dtype)


def aa_dense_nn_forward(x, w1, b1, w2, b2):
    """Forward pass of AADenseNN: relu(x @ w1.T + b1) @ w2.T + b2.

    Args:
      x:  [B, 20] float32
      w1: [2, 20] float32 (PyTorch layout: [out, in])
      b1: [2]     float32
      w2: [1, 2]  float32
      b2: [1]     float32
    Returns:
      [B, 1] float32
    """
    # NOTE: for tiny batches (B << 1024) a plain fused jnp expression is faster
    # than any pallas_call launch; this wrapper always runs the kernel so the
    # Pallas path is what gets tested/benchmarked.
    B = x.shape[0]

    # Tile size: multiple of 128 (lane axis), capped at TILE_B_MAX; pad B up.
    b_pad128 = ((B + 127) // 128) * 128
    tile_b = min(TILE_B_MAX, b_pad128)
    b_pad = ((B + tile_b - 1) // tile_b) * tile_b
    grid = (b_pad // tile_b,)

    # Layout plumbing (done once in the wrapper): batch -> lane axis.
    x_pad = jnp.pad(x.astype(jnp.float32), ((0, b_pad - B), (0, 0)))
    xt = x_pad.T                                   # [20, B_pad]
    w2_row = w2.reshape(HIDDEN).astype(jnp.float32)

    param_bytes = 4 * (HIDDEN * IN_FEATURES + HIDDEN + HIDDEN * OUT_FEATURES + OUT_FEATURES)
    cost = pl.CostEstimate(
        flops=2 * b_pad * (IN_FEATURES * HIDDEN + HIDDEN * OUT_FEATURES) + 3 * b_pad * HIDDEN,
        transcendentals=0,
        bytes_accessed=4 * b_pad * (IN_FEATURES + OUT_FEATURES) + param_bytes,
    )

    smem_spec = pl.BlockSpec(memory_space=pltpu.MemorySpace.SMEM)

    yt = pl.pallas_call(
        _dense_nn_kernel,
        out_shape=jax.ShapeDtypeStruct((OUT_FEATURES, b_pad), jnp.float32),
        grid=grid,
        in_specs=[
            pl.BlockSpec((HIDDEN, IN_FEATURES), lambda i: (0, 0)),   # w1: resident in VMEM
            smem_spec,                                               # b1: SMEM scalars
            smem_spec,                                               # w2 row: SMEM scalars
            smem_spec,                                               # b2: SMEM scalar
            pl.BlockSpec((IN_FEATURES, tile_b), lambda i: (0, i)),   # xT: streamed, double-buffered
        ],
        out_specs=pl.BlockSpec((OUT_FEATURES, tile_b), lambda i: (0, i)),
        compiler_params=pltpu.CompilerParams(
            dimension_semantics=("parallel",),       # lets v7x shard over 2 TCs
            vmem_limit_bytes=32 * 1024 * 1024,       # explicit, safe on v5e/v6e/v7x
        ),
        cost_estimate=cost,
    )(w1.astype(jnp.float32), b1.astype(jnp.float32), w2_row,
      b2.astype(jnp.float32), xt)

    # [1, B_pad] -> take first B columns -> [B, 1]; the reshape is free
    # (contiguous memory), only the pad slice is real work.
    return yt[0, :B].reshape(B, OUT_FEATURES)


def init_params(key):
    """Deterministic init mirroring nn.Linear default (uniform in +-1/sqrt(fan_in))."""
    k1, k2, k3, k4 = jax.random.split(key, 4)
    bound1 = 1.0 / jnp.sqrt(IN_FEATURES)
    bound2 = 1.0 / jnp.sqrt(HIDDEN)
    w1 = jax.random.uniform(k1, (HIDDEN, IN_FEATURES), jnp.float32, -bound1, bound1)
    b1 = jax.random.uniform(k2, (HIDDEN,), jnp.float32, -bound1, bound1)
    w2 = jax.random.uniform(k3, (OUT_FEATURES, HIDDEN), jnp.float32, -bound2, bound2)
    b2 = jax.random.uniform(k4, (OUT_FEATURES,), jnp.float32, -bound2, bound2)
    return w1, b1, w2, b2


def _reference(x, w1, b1, w2, b2):
    return jnp.maximum(x @ w1.T + b1, 0.0) @ w2.T + b2


if __name__ == "__main__":
    key = jax.random.PRNGKey(0)
    k_x, k_x2, k_p = jax.random.split(key, 3)
    w1, b1, w2, b2 = init_params(k_p)

    # Small batch (module-consistent shape), exercises padding 8 -> 128.
    B = 8
    x = jax.random.normal(k_x, (B, IN_FEATURES), jnp.float32)
    out = jax.block_until_ready(aa_dense_nn_forward(x, w1, b1, w2, b2))
    ref = _reference(x, w1, b1, w2, b2)
    assert out.shape == (B, OUT_FEATURES)
    assert jnp.allclose(out, ref, atol=1e-5, rtol=1e-5)

    # Non-multiple-of-128 batch, checks pad + slice correctness.
    B2 = 300
    x2 = jax.random.normal(k_x2, (B2, IN_FEATURES), jnp.float32)
    out2 = jax.block_until_ready(aa_dense_nn_forward(x2, w1, b1, w2, b2))
    ref2 = _reference(x2, w1, b1, w2, b2)
    assert out2.shape == (B2, OUT_FEATURES)
    assert jnp.allclose(out2, ref2, atol=1e-5, rtol=1e-5)

    print("KERNEL_OK")
</pallas_src>

<mosaic_0001>
module attributes {stable_mosaic.version = 11 : i64} {
  func.func @_dense_nn_kernel(%arg0: i32, %arg1: memref<2x20xf32, #tpu.memory_space<vmem>>, %arg2: memref<2xf32, #tpu.memory_space<smem>>, %arg3: memref<2xf32, #tpu.memory_space<smem>>, %arg4: memref<1xf32, #tpu.memory_space<smem>>, %arg5: memref<20x128xf32, #tpu.memory_space<vmem>>, %arg6: memref<1x128xf32, #tpu.memory_space<vmem>>) attributes {dimension_semantics = [#tpu.dimension_semantics<parallel>], iteration_bounds = array<i64: 1>, scalar_prefetch = 0 : i64, scratch_operands = 0 : i64, tpu.core_type = #tpu.core_type<tc>, window_params = [{pipeline_mode = #tpu.pipeline_mode<synchronous>, transform_indices = @transform_0, window_bounds = array<i64: 2, 20>}, {transform_indices = @transform_1, window_bounds = array<i64: 2>}, {transform_indices = @transform_2, window_bounds = array<i64: 2>}, {transform_indices = @transform_3, window_bounds = array<i64: 1>}, {transform_indices = @transform_4, window_bounds = array<i64: 20, 128>}, {transform_indices = @transform_5, window_bounds = array<i64: 1, 128>}]} {
    %c0 = arith.constant 0 : index
    %c0_0 = arith.constant 0 : index
    %0 = vector.load %arg1[%c0, %c0_0] : memref<2x20xf32, #tpu.memory_space<vmem>>, vector<2x20xf32>
    %c0_1 = arith.constant 0 : index
    %c0_2 = arith.constant 0 : index
    %1 = vector.load %arg5[%c0_1, %c0_2] : memref<20x128xf32, #tpu.memory_space<vmem>>, vector<20x128xf32>
    %cst = arith.constant dense<0.000000e+00> : vector<2x128xf32>
    %2 = tpu.matmul %0, %1, %cst {dimension_numbers = #tpu.dot_dimension_numbers<[1], [0], [0], [1], [0, 0, 1, 1], [], []>} : vector<2x20xf32>, vector<20x128xf32>, vector<2x128xf32> -> vector<2x128xf32>
    %3 = vector.extract_strided_slice %2 {offsets = [0, 0], sizes = [1, 128], strides = [1, 1]} : vector<2x128xf32> to vector<1x128xf32>
    %c0_3 = arith.constant 0 : index
    %4 = memref.load %arg2[%c0_3] : memref<2xf32, #tpu.memory_space<smem>>
    %5 = vector.broadcast %4 : f32 to vector<1x128xf32>
    %6 = arith.addf %3, %5 : vector<1x128xf32>
    %cst_4 = arith.constant 0.000000e+00 : f32
    %7 = vector.broadcast %cst_4 : f32 to vector<1x128xf32>
    %8 = arith.maximumf %6, %7 : vector<1x128xf32>
    %9 = vector.extract_strided_slice %2 {offsets = [1, 0], sizes = [1, 128], strides = [1, 1]} : vector<2x128xf32> to vector<1x128xf32>
    %c1 = arith.constant 1 : index
    %10 = memref.load %arg2[%c1] : memref<2xf32, #tpu.memory_space<smem>>
    %11 = vector.broadcast %10 : f32 to vector<1x128xf32>
    %12 = arith.addf %9, %11 : vector<1x128xf32>
    %cst_5 = arith.constant 0.000000e+00 : f32
    %13 = vector.broadcast %cst_5 : f32 to vector<1x128xf32>
    %14 = arith.maximumf %12, %13 : vector<1x128xf32>
    %c0_6 = arith.constant 0 : index
    %15 = memref.load %arg3[%c0_6] : memref<2xf32, #tpu.memory_space<smem>>
    %16 = vector.broadcast %15 : f32 to vector<1x128xf32>
    %17 = arith.mulf %8, %16 : vector<1x128xf32>
    %c1_7 = arith.constant 1 : index
    %18 = memref.load %arg3[%c1_7] : memref<2xf32, #tpu.memory_space<smem>>
    %19 = vector.broadcast %18 : f32 to vector<1x128xf32>
    %20 = arith.mulf %14, %19 : vector<1x128xf32>
    %21 = arith.addf %17, %20 : vector<1x128xf32>
    %c0_8 = arith.constant 0 : index
    %22 = memref.load %arg4[%c0_8] : memref<1xf32, #tpu.memory_space<smem>>
    %23 = vector.broadcast %22 : f32 to vector<1x128xf32>
    %24 = arith.addf %21, %23 : vector<1x128xf32>
    %c0_9 = arith.constant 0 : index
    %c0_10 = arith.constant 0 : index
    %25 = vector.load %arg6[%c0_9, %c0_10] : memref<1x128xf32, #tpu.memory_space<vmem>>, vector<1x128xf32>
    tpu.vector_store %arg6[%c0_9, %c0_10], %24 {strides = array<i32>} : memref<1x128xf32, #tpu.memory_space<vmem>>, vector<1x128xf32>,
    return
  }
  func.func @transform_0(%arg0: i32) -> (i32, i32) {
    %c0_i32 = arith.constant 0 : i32
    %c0_i32_0 = arith.constant 0 : i32
    %c0_i32_1 = arith.constant 0 : i32
    return %c0_i32, %c0_i32_0 : i32, i32
  }
  func.func @transform_1(%arg0: i32) -> i32 {
    %c0_i32 = arith.constant 0 : i32
    %c0_i32_0 = arith.constant 0 : i32
    return %c0_i32 : i32
  }
  func.func @transform_2(%arg0: i32) -> i32 {
    %c0_i32 = arith.constant 0 : i32
    %c0_i32_0 = arith.constant 0 : i32
    return %c0_i32 : i32
  }
  func.func @transform_3(%arg0: i32) -> i32 {
    %c0_i32 = arith.constant 0 : i32
    %c0_i32_0 = arith.constant 0 : i32
    return %c0_i32 : i32
  }
  func.func @transform_4(%arg0: i32) -> (i32, i32) {
    %c0_i32 = arith.constant 0 : i32
    %c0_i32_0 = arith.constant 0 : i32
    return %c0_i32, %arg0 : i32, i32
  }
  func.func @transform_5(%arg0: i32) -> (i32, i32) {
    %c0_i32 = arith.constant 0 : i32
    %c0_i32_0 = arith.constant 0 : i32
    return %c0_i32, %arg0 : i32, i32
  }
}

</mosaic_0001>

<llo_original>
// kernel: tpu_custom_call.1
$region0: #{tpu_custom_call.1}
  #allocation0 [shape = 'u32[]', space=smem, size = 0x4, offset = 0x4, fixed_abs, tag = 'smem constant byte address 0x4 - core index']
  #allocation1 [shape = 'u32[72,128]{1,0:T(1,128)}', space=vmem, size = 0x9000, scoped, tag = 'internal scratch']
  #allocation2 [shape = 'f32[1]{0:T(128)S(6)}', space=smem, size = 0x200, scoped, tag = 'scoped memory for tpu_custom_call.1']
  %s0 = inlined_call_operand.vmem [shape: f32[2,20], index: 0, kind: input, shape index: {}]
  %s1 = inlined_call_operand.hbm [shape: f32[2], index: 1, kind: input, shape index: {}]
  %s2 = inlined_call_operand.vmem [shape: f32[2], index: 2, kind: input, shape index: {}]
  %s3 = inlined_call_operand.<no memory space> [shape: f32[1], index: 3, kind: input, shape index: {}]
  %s4 = inlined_call_operand.hbm [shape: f32[20,128], index: 4, kind: input, shape index: {}]
  %s5 = inlined_call_operand.hbm [shape: f32[1,128], index: 5, kind: output, shape index: {}]
  %s6 = sld [smem:[#allocation0]]
  $region42: #{tpu_custom_call.1} parent=0
    _
  %s8 = ssub.s32 1, %s6
  %s9 = scalar_select 0, %s8, %s6
  %10 = sst [smem:[#allocation2]] %s3
  $region1: #{tpu_custom_call.1} parent=0
    #allocation3 [shape = 'u8[512]{0}', space=smem, size = 0x200, scoped, tag = 'input window, operand 1, single buffered']
    #allocation4 [shape = 's32[1]{0}', space=sflag, size = 0x4, scoped, tag = 'scoped memory for tpu_custom_call.1']
    #allocation5 [shape = 's32[1]{0}', space=sflag, size = 0x4, scoped, tag = 'scoped memory for tpu_custom_call.1']
    #allocation6 [shape = 's32[1]{0}', space=sflag, size = 0x4, scoped, tag = 'scoped memory for tpu_custom_call.1']
    #allocation7 [shape = 's32[1]{0}', space=sflag, size = 0x4, scoped, tag = 'scoped memory for tpu_custom_call.1']
    #allocation8 [shape = 'u8[512]{0}', space=smem, size = 0x200, scoped, tag = 'input window, operand 2, single buffered']
    #allocation9 [shape = 'u8[12288]{0}', space=vmem, size = 0x3000, scoped, tag = 'input window, operand 4, single buffered']
    #allocation10 [shape = 'u8[512]{0}', space=vmem, size = 0x400, scoped, tag = 'output window, operand 0, single buffered']
    %11 = vsyncpa [#allocation6], 0
    %12 = vsyncpa [#allocation7], 0
    %13 = vsyncpa [#allocation4], 0
    %14 = vsyncpa [#allocation5], 0
    // Predicated region
    $region2: #{tpu_custom_call.1} parent=1 // pred_check
      _
    $region3: #{tpu_custom_call.1} parent=1 // pred_check_branch
      %16 = sbr.rel (0) target = $region5
    $region4: #{tpu_custom_call.1} parent=1 // pred_region
      _
    $region5: #{tpu_custom_call.1} parent=1 // pred_fallthru
      _
    // Predicated region
    $region6: #{tpu_custom_call.1} parent=1 // pred_check
      _
    $region7: #{tpu_custom_call.1} parent=1 // pred_check_branch
      %18 = sbr.rel (0) target = $region9
    $region8: #{tpu_custom_call.1} parent=1 // pred_region
      %20 = vsyncadd [#allocation6], 0
      %s22 = sshll.u32 %s1, 4
      %s23 = int_to_ptr.hbm [resolvable:$true] %s22
      %25 = dma.hbm_to_smem %s23, 16, [#allocation3], [#allocation6]
    $region9: #{tpu_custom_call.1} parent=1 // pred_fallthru
      _
    // Predicated region
    $region10: #{tpu_custom_call.1} parent=1 // pred_check
      _
    $region11: #{tpu_custom_call.1} parent=1 // pred_check_branch
      %27 = sbr.rel (0) target = $region13
    $region12: #{tpu_custom_call.1} parent=1 // pred_region
      %29 = vsyncadd [#allocation7], 0
      %s31 = sshll.u32 %s2, 4
      %s32 = int_to_ptr.vmem [resolvable:$true] %s31
      %34 = dma.vmem_to_smem %s32, 16, [#allocation8], [#allocation7]
    $region13: #{tpu_custom_call.1} parent=1 // pred_fallthru
      _
    // Predicated region
    $region14: #{tpu_custom_call.1} parent=1 // pred_check
      _
    $region15: #{tpu_custom_call.1} parent=1 // pred_check_branch
      %36 = sbr.rel (0) target = $region17
    $region16: #{tpu_custom_call.1} parent=1 // pred_region
      _
    $region17: #{tpu_custom_call.1} parent=1 // pred_fallthru
      _
    // Predicated region
    $region18: #{tpu_custom_call.1} parent=1 // pred_check
      _
    $region19: #{tpu_custom_call.1} parent=1 // pred_check_branch
      %38 = sbr.rel (0) target = $region21
    $region20: #{tpu_custom_call.1} parent=1 // pred_region
      %40 = vsyncadd [#allocation4], 0
      %s41 = sshll.u32 %s4, 4
      %s42 = int_to_ptr.hbm [resolvable:$true] %s41
      %s43 = sshll.u32 [#allocation9], 4
      %s44 = int_to_ptr.vmem [resolvable:$true] %s43
      %49 = dma.hbm_to_vmem [thread:$0]  %s42, 384, %s44, [#allocation4], 128, 128, 8
    $region21: #{tpu_custom_call.1} parent=1 // pred_fallthru
      _
    // Predicated region
    $region22: #{tpu_custom_call.1} parent=1 // pred_check
      _
    $region23: #{tpu_custom_call.1} parent=1 // pred_check_branch
      %51 = sbr.rel (0) target = $region25
    $region24: #{tpu_custom_call.1} parent=1 // pred_region
      %53 = dma.done [#allocation6], 16
    $region25: #{tpu_custom_call.1} parent=1 // pred_fallthru
      _
    // Predicated region
    $region26: #{tpu_custom_call.1} parent=1 // pred_check
      _
    $region27: #{tpu_custom_call.1} parent=1 // pred_check_branch
      %55 = sbr.rel (0) target = $region29
    $region28: #{tpu_custom_call.1} parent=1 // pred_region
      %57 = dma.done [#allocation7], 16
    $region29: #{tpu_custom_call.1} parent=1 // pred_fallthru
      _
    // Predicated region
    $region30: #{tpu_custom_call.1} parent=1 // pred_check
      _
    $region31: #{tpu_custom_call.1} parent=1 // pred_check_branch
      %59 = sbr.rel (0) target = $region33
    $region32: #{tpu_custom_call.1} parent=1 // pred_region
      %61 = dma.done [#allocation4], 384
    $region33: #{tpu_custom_call.1} parent=1 // pred_fallthru
      _
    %62 = sfence
    %v63 = vld [vmem:[%s0] sm:$0x3]
    %v64 = vld [vmem:[#allocation9] sm:$0xff]
    %v65 = vld [vmem:[#allocation9 + $0x8] sm:$0xff]
    %v66 = vld [vmem:[#allocation9 + $0x10] sm:$0xf]
    %vm67 = vcmask 162816
    %v69 = vsel %vm67, %v63, 0
    %vm71 = vcmask 1043456
    %v73 = vsel %vm71, %v66, 0
    %75 = vmatpush.msra.mxu0 0.0
    %76 = vmatpush.msra.mxu0 0.0
    %77 = vmatpush.msra.mxu0 0.0
    %78 = vmatpush.msra.mxu0 0.0
    %79 = vmatpush.msra.mxu0 0.0
    %80 = vmatpush.msra.mxu0 0.0
    %81 = vmatpush.msra.mxu0 0.0
    %82 = vmatpush.msra.mxu0 0.0
    %83 = vmatpush.msra.mxu0 0.0
    %84 = vmatpush.msra.mxu0 0.0
    %85 = vmatpush.msra.mxu0 0.0
    %86 = vmatpush.msra.mxu0 0.0
    %87 = vmatpush.msra.mxu0 0.0
    %88 = vmatpush.msra.mxu0 %v73
    %89 = vmatpush.msra.mxu0 %v65
    %90 = vmatpush.msra.mxu0 %v64
    %91 = vmatmul.f32.gmra.mxu0 %v69
    %v92 = vpop.f32.mrf.mxu0
    %v93 = vadd.f32 0.0, %v92
    %94 = vdwg.mxu0
    %s95 = sld [smem:[#allocation3]]
    %v96 = vstv %s95
    %v97 = vadd.f32 %v93, %v96
    %v98 = vmax.f32 %v97, 0.0
    %s99 = sld [smem:[#allocation3 + $0x1]]
    %v100 = vstv %s99
    %v101 = vadd.f32 %v93, %v100
    %v102 = vmax.f32 %v101, 0.0
    %s103 = sld [smem:[#allocation8]]
    %v104 = vstv %s103
    %v105 = vmul.f32 %v98, %v104
    %s106 = sld [smem:[#allocation8 + $0x1]]
    %v107 = vstv %s106
    %v108 = vmul.f32 %v102, %v107
    %v110 = vrot.slane %v108, 1
    %v112 = vadd.f32 %v105, %v110
    %s113 = sld [smem:[#allocation2]]
    %v114 = vstv %s113
    %v115 = vadd.f32 %v112, %v114
    %116 = vst [vmem:[#allocation10] sm:$0x1] %v115
    // Predicated region
    $region34: #{tpu_custom_call.1} parent=1 // pred_check
      _
    $region35: #{tpu_custom_call.1} parent=1 // pred_check_branch
      %118 = sbr.rel (0) target = $region37
    $region36: #{tpu_custom_call.1} parent=1 // pred_region
      %120 = vsyncadd [#allocation5], 0
      %s122 = sshll.u32 [#allocation10], 4
      %s123 = int_to_ptr.vmem [resolvable:$true] %s122
      %s124 = sshll.u32 %s5, 4
      %s125 = int_to_ptr.hbm [resolvable:$true] %s124
      %127 = dma.vmem_to_hbm [thread:$0]  %s123, 16, %s125, [#allocation5]
    $region37: #{tpu_custom_call.1} parent=1 // pred_fallthru
      _
    // Predicated region
    $region38: #{tpu_custom_call.1} parent=1 // pred_check
      _
    $region39: #{tpu_custom_call.1} parent=1 // pred_check_branch
      %129 = sbr.rel (0) target = $region41
    $region40: #{tpu_custom_call.1} parent=1 // pred_region
      %131 = dma.done [#allocation5], 16
    $region41: #{tpu_custom_call.1} parent=1 // pred_fallthru
      _
    %132 = vsyncpa [#allocation4], 1
    %133 = vsyncpa [#allocation5], 1
    %134 = vsyncpa [#allocation6], 1
    %135 = vsyncpa [#allocation7], 1

</llo_original>
